<compile_context>
chip_gen: v6e
topology: v6e:2x2x1
jax: 0.10.0
libtpu: 0.0.40
codegen_flags: <defaults>
</compile_context>

<pallas_src>
import functools

import jax
import jax.numpy as jnp
from jax.experimental import pallas as pl
from jax.experimental.pallas import tpu as pltpu

_MIB = 1024 * 1024


# ----------------------------------------------------------------------------
# Hardware / tiling helpers
# ----------------------------------------------------------------------------
@functools.lru_cache(maxsize=None)
def _vmem_capacity_bytes():
    """Physical VMEM per TensorCore (128 MiB on v5e/v6e, 64 MiB on v7x)."""
    try:
        cap = getattr(pltpu.get_tpu_info(), "vmem_capacity_bytes", None)
        if cap:
            return int(cap)
    except Exception:
        pass
    return 64 * _MIB  # conservative fallback (v7x)


def _round_up8(v):
    return max(8, ((int(v) + 7) // 8) * 8)


def _round_down8(v):
    return max(8, (int(v) // 8) * 8)


def _vmem_limit(estimate_bytes, cap):
    # 1.5x headroom over the per-step estimate (which includes f32 intermediates),
    # never above 85% of physical VMEM (room for Mosaic scratch), never below 16 MiB.
    return int(min(int(0.85 * cap), max(16 * _MIB, int(1.5 * estimate_bytes))))


# ----------------------------------------------------------------------------
# Shared gate math (values in, values out; both kernels reuse it)
# ----------------------------------------------------------------------------
def _gate_epilogue(x_f32, h_f32, invdeg, wx4, wh4, wrh, b4):
    """Returns (agg_scale, rest, proj_l), all f32 [rows, H]:
         agg_scale = (1-z) * inv_deg
         rest      = (1-z) * (root term + bias) + z * h_prev
         proj_l    = neighbour message (pre mean-aggregation)
    """
    f32, bf16 = jnp.float32, jnp.bfloat16
    H = h_f32.shape[-1]
    # Two 128-lane MXU matmuls (h folded into the gate weight, candidate cols zero).
    g = (jnp.dot(x_f32.astype(bf16), wx4, preferred_element_type=f32)
         + jnp.dot(h_f32.astype(bf16), wh4, preferred_element_type=f32)
         + b4)
    r = jax.nn.sigmoid(g[:, 0:H])
    z = jax.nn.sigmoid(g[:, H:2 * H])
    rh = r * h_f32
    prh = jnp.dot(rh.astype(bf16), wrh, preferred_element_type=f32)
    proj = g[:, 2 * H:3 * H] + prh[:, 0:H]          # x@Wl_x + (r*h)@Wl_h
    base = g[:, 3 * H:4 * H] + prh[:, H:2 * H]      # x@Wr_x + (r*h)@Wr_h + bl
    omz = 1.0 - z
    return omz * invdeg, omz * base + z * h_f32, proj


# ----------------------------------------------------------------------------
# Kernel 1 (tiled path): gates / projections -> lane-dense packed output
# ----------------------------------------------------------------------------
def gcru_gates_kernel(x_ref, h_ref, invdeg_ref, wx_ref, wh_ref, wrh_ref, b_ref,
                      packed_ref):
    H = h_ref.shape[-1]
    scale, rest, proj = _gate_epilogue(
        x_ref[...], h_ref[...], invdeg_ref[...],
        wx_ref[...], wh_ref[...], wrh_ref[...], b_ref[...])
    # Lane-dense [tile, 4H] = [tile, 128] packed output (full-width writeback DMA).
    packed_ref[:, 0:H] = scale
    packed_ref[:, H:2 * H] = rest
    packed_ref[:, 2 * H:3 * H] = proj
    packed_ref[:, 3 * H:4 * H] = jnp.zeros_like(proj)   # pad to 128 lanes


# ----------------------------------------------------------------------------
# Kernel 2 (tiled path): streamed 0/1 adjacency rows @ message matrix + blend
# ----------------------------------------------------------------------------
def gcru_agg_kernel(adj_ref, rows_ref, full_ref, o_ref):
    H = o_ref.shape[-1]
    # Resident packed matrix: proj columns for ALL nodes, cast to bf16 for the MXU
    # (recast per grid step; negligible vs. the streamed N^2 adjacency bytes).
    proj = full_ref[:, 2 * H:3 * H].astype(jnp.bfloat16)
    agg = jnp.dot(adj_ref[...], proj, preferred_element_type=jnp.float32)
    rows = rows_ref[...]
    # h_t = (1-z) * inv_deg * (A01 @ proj)  +  [(1-z)*base + z*h_prev]
    o_ref[...] = rows[:, 0:H] * agg + rows[:, H:2 * H]


# ----------------------------------------------------------------------------
# Fused single-tile kernel (small graphs: gates + aggregation + blend in one body)
# ----------------------------------------------------------------------------
def gcru_fused_kernel(x_ref, h_ref, adj_ref, invdeg_ref, wx_ref, wh_ref, wrh_ref,
                      b_ref, o_ref):
    scale, rest, proj = _gate_epilogue(
        x_ref[...], h_ref[...], invdeg_ref[...],
        wx_ref[...], wh_ref[...], wrh_ref[...], b_ref[...])
    agg = jnp.dot(adj_ref[...], proj.astype(jnp.bfloat16),
                  preferred_element_type=jnp.float32)
    o_ref[...] = scale * agg + rest


# ----------------------------------------------------------------------------
# Wrappers
# ----------------------------------------------------------------------------
@jax.jit
def _gcru_cell_fused(x, adj01_bf16, inv_deg, h_prev, fused):
    n, in_feat = x.shape
    hidden = h_prev.shape[-1]
    wx4, wh4, wrh, b4 = fused["wx4"], fused["wh4"], fused["wrh"], fused["b4"]
    cap = _vmem_capacity_bytes()
    est = (n * (in_feat + 2 * hidden + 1) * 4 + n * n * 2
           + (in_feat + hidden) * 4 * hidden * 2 + hidden * 2 * hidden * 2
           + 4 * hidden * 4 + 6 * n * 4 * hidden * 4)
    flops = 2 * n * hidden * (4 * in_feat + 6 * hidden) + 2 * n * n * hidden
    return pl.pallas_call(
        gcru_fused_kernel,
        out_shape=jax.ShapeDtypeStruct((n, hidden), jnp.float32),
        grid=(1,),
        in_specs=[
            pl.BlockSpec((n, in_feat), lambda i: (0, 0)),
            pl.BlockSpec((n, hidden), lambda i: (0, 0)),
            pl.BlockSpec((n, n), lambda i: (0, 0)),
            pl.BlockSpec((n, 1), lambda i: (0, 0)),
            pl.BlockSpec((in_feat, 4 * hidden), lambda i: (0, 0)),
            pl.BlockSpec((hidden, 4 * hidden), lambda i: (0, 0)),
            pl.BlockSpec((hidden, 2 * hidden), lambda i: (0, 0)),
            pl.BlockSpec((1, 4 * hidden), lambda i: (0, 0)),
        ],
        out_specs=pl.BlockSpec((n, hidden), lambda i: (0, 0)),
        compiler_params=pltpu.CompilerParams(
            dimension_semantics=("arbitrary",),
            vmem_limit_bytes=_vmem_limit(est, cap)),
        cost_estimate=pl.CostEstimate(
            flops=int(flops), transcendentals=int(2 * n * hidden),
            bytes_accessed=int(est)),
    )(x, h_prev, adj01_bf16, inv_deg, wx4, wh4, wrh, b4)


@jax.jit
def _gcru_cell_tiled(x, adj01_bf16, inv_deg, h_prev, fused):
    n, in_feat = x.shape
    hidden = h_prev.shape[-1]
    f32 = jnp.float32
    wx4, wh4, wrh, b4 = fused["wx4"], fused["wh4"], fused["wrh"], fused["b4"]
    cap = _vmem_capacity_bytes()
    half = _round_up8(pl.cdiv(n, 2))   # keep >= 2 grid steps so both v7x TCs stay busy

    # ---- Kernel 1: gates / projections (cheap per row -> its own, big tile) ----
    tile1 = min(_round_down8(min(n, 4096)), half)
    grid1 = (pl.cdiv(n, tile1),)
    est1 = (2 * tile1 * (in_feat * 4 + hidden * 4 + 4 + 4 * hidden * 4)      # x,h,invdeg,packed (x2 bufs)
            + 2 * (in_feat * 4 * hidden * 2 + hidden * 4 * hidden * 2
                   + hidden * 2 * hidden * 2 + 4 * hidden * 4)               # resident weights
            + 4 * tile1 * 4 * hidden * 4)                                    # f32 intermediates
    flops1 = 2 * n * hidden * (4 * in_feat + 6 * hidden)
    bytes1 = (n * (in_feat + hidden + 1) * 4 + n * 4 * hidden * 4
              + (in_feat + hidden) * 4 * hidden * 2 + hidden * 2 * hidden * 2
              + 4 * hidden * 4)

    packed = pl.pallas_call(
        gcru_gates_kernel,
        out_shape=jax.ShapeDtypeStruct((n, 4 * hidden), f32),
        grid=grid1,
        in_specs=[
            pl.BlockSpec((tile1, in_feat), lambda i: (i, 0)),
            pl.BlockSpec((tile1, hidden), lambda i: (i, 0)),
            pl.BlockSpec((tile1, 1), lambda i: (i, 0)),
            pl.BlockSpec((in_feat, 4 * hidden), lambda i: (0, 0)),   # resident weights
            pl.BlockSpec((hidden, 4 * hidden), lambda i: (0, 0)),
            pl.BlockSpec((hidden, 2 * hidden), lambda i: (0, 0)),
            pl.BlockSpec((1, 4 * hidden), lambda i: (0, 0)),
        ],
        out_specs=pl.BlockSpec((tile1, 4 * hidden), lambda i: (i, 0)),
        compiler_params=pltpu.CompilerParams(
            dimension_semantics=("parallel",),
            vmem_limit_bytes=_vmem_limit(est1, cap)),
        cost_estimate=pl.CostEstimate(
            flops=int(flops1), transcendentals=int(2 * n * hidden),
            bytes_accessed=int(bytes1)),
    )(x, h_prev, inv_deg, wx4, wh4, wrh, b4)

    # ---- Kernel 2: HBM-bound adjacency stream (big row tiles, VMEM-budgeted) ----
    adj_budget = int(0.45 * cap)                                   # double-buffered bf16 rows
    rows_by_budget = _round_down8(max(8, adj_budget // (2 * 2 * n)))
    tile2 = min(_round_down8(min(n, 1024)), rows_by_budget, half)
    grid2 = (pl.cdiv(n, tile2),)
    est2 = (2 * tile2 * (n * 2 + 4 * hidden * 4 + hidden * 4)       # adj, rows, out (x2 bufs)
            + 2 * n * 4 * hidden * 4                                # resident packed matrix
            + n * hidden * 2 + 3 * tile2 * hidden * 4)              # bf16 proj + f32 temps
    flops2 = 2 * n * n * hidden
    bytes2 = n * n * 2 + 2 * n * 4 * hidden * 4 + n * hidden * 4

    # TODO(synk): when stepping inside lax.scan, alias h_prev with the output
    # (input_output_aliases) to drop one [N,H] HBM buffer per timestep.
    h_new = pl.pallas_call(
        gcru_agg_kernel,
        out_shape=jax.ShapeDtypeStruct((n, hidden), f32),
        grid=grid2,
        in_specs=[
            pl.BlockSpec((tile2, n), lambda i: (i, 0)),            # streamed 0/1 adjacency rows
            pl.BlockSpec((tile2, 4 * hidden), lambda i: (i, 0)),   # streamed packed rows
            pl.BlockSpec((n, 4 * hidden), lambda i: (0, 0)),       # resident packed (proj cols)
        ],
        out_specs=pl.BlockSpec((tile2, hidden), lambda i: (i, 0)),
        compiler_params=pltpu.CompilerParams(
            dimension_semantics=("parallel",),
            vmem_limit_bytes=_vmem_limit(est2, cap)),
        cost_estimate=pl.CostEstimate(
            flops=int(flops2), transcendentals=0, bytes_accessed=int(bytes2)),
    )(adj01_bf16, packed, packed)
    return h_new


def gcru_cell(x, adj01_bf16, inv_deg, h_prev, fused):
    """GCRUCell forward.  adj01_bf16: exact-count adjacency rows (dst-major, bf16);
    inv_deg: f32 [N,1] reciprocal in-degree (0 for isolated nodes)."""
    if x.shape[0] <= 1024:           # whole graph fits one tile -> single fused kernel
        return _gcru_cell_fused(x, adj01_bf16, inv_deg, h_prev, fused)
    return _gcru_cell_tiled(x, adj01_bf16, inv_deg, h_prev, fused)


# ----------------------------------------------------------------------------
# Graph glue (hoisted: build once per static graph, not per timestep)
# ----------------------------------------------------------------------------
def edge_index_to_graph(edge_index, num_nodes):
    """Returns (A_counts, inv_deg): A_counts[i,j] = #edges j->i (exact small integers,
    exactly representable in bf16); inv_deg[i] = 1/in_deg(i), 0 for isolated nodes.
    PyG 'mean' aggregation == inv_deg * (A_counts @ messages)."""
    src, dst = edge_index[0], edge_index[1]
    a = jnp.zeros((num_nodes, num_nodes), jnp.float32)
    a = a.at[dst, src].add(1.0)
    deg = a.sum(axis=1, keepdims=True)
    inv_deg = jnp.where(deg > 0, 1.0 / jnp.maximum(deg, 1.0), 0.0)
    return a, inv_deg
# TODO(synk): for genuinely sparse graphs replace the dense O(N^2) adjacency stream with
# a CSR gather aggregation (PrefetchScalarGridSpec row pointers / column indices).
# TODO(synk): on v7x, stream the exact 0/1 adjacency as fp8 to halve kernel-2 HBM bytes.


def fuse_params(params):
    """Fuse the per-gate weights so both gate matmuls emit the full 4H (=128) lanes:
       wx4 = [Wxr | Wxz | Wl_x | Wr_x]   (In x 4H, bf16)
       wh4 = [Whr | Whz |  0   |  0  ]   (H  x 4H, bf16)  -- h folded into the gate matmul
       wrh = [Wl_h | Wr_h]               (H  x 2H, bf16)  -- applied to r*h
       b4  = [bxr | bxz |  0   | bl ]    (1  x 4H, f32)
    """
    H = params["whr"].shape[0]
    zeros_h = jnp.zeros((H, H), jnp.float32)
    wx4 = jnp.concatenate(
        [params["wxr"], params["wxz"], params["wl_x"], params["wr_x"]], axis=1)
    wh4 = jnp.concatenate([params["whr"], params["whz"], zeros_h, zeros_h], axis=1)
    wrh = jnp.concatenate([params["wl_h"], params["wr_h"]], axis=1)
    b4 = jnp.concatenate(
        [params["bxr"], params["bxz"], jnp.zeros_like(params["bl"]), params["bl"]],
        axis=1)
    return {"wx4": wx4.astype(jnp.bfloat16), "wh4": wh4.astype(jnp.bfloat16),
            "wrh": wrh.astype(jnp.bfloat16), "b4": b4.astype(jnp.float32)}


# ----------------------------------------------------------------------------
# Pure-JAX f32 reference (correctness check)
# ----------------------------------------------------------------------------
def gcru_ref(x, edge_index, h_prev, params, num_nodes):
    a_counts, inv_deg = edge_index_to_graph(edge_index, num_nodes)
    adj_mean = a_counts * inv_deg
    r = jax.nn.sigmoid(x @ params["wxr"] + params["bxr"] + h_prev @ params["whr"])
    z = jax.nn.sigmoid(x @ params["wxz"] + params["bxz"] + h_prev @ params["whz"])
    cat = jnp.concatenate([x, r * h_prev], axis=-1)
    agg = adj_mean @ cat
    wl = jnp.concatenate([params["wl_x"], params["wl_h"]], axis=0)
    wr = jnp.concatenate([params["wr_x"], params["wr_h"]], axis=0)
    n = agg @ wl + params["bl"] + cat @ wr
    return (1.0 - z) * n + z * h_prev


# ----------------------------------------------------------------------------
# Deterministic parameter init (PyTorch-style uniform(-1/sqrt(fan_in), +..))
# ----------------------------------------------------------------------------
def init_params(key, input_size, hidden_size):
    ks = jax.random.split(key, 10)

    def lin_w(k, fan_in, fan_out):
        bound = 1.0 / jnp.sqrt(fan_in)
        return jax.random.uniform(k, (fan_in, fan_out), jnp.float32, -bound, bound)

    def lin_b(k, fan_in, fan_out):
        bound = 1.0 / jnp.sqrt(fan_in)
        return jax.random.uniform(k, (1, fan_out), jnp.float32, -bound, bound)

    cat_in = input_size + hidden_size
    return {
        "wxr": lin_w(ks[0], input_size, hidden_size),
        "bxr": lin_b(ks[1], input_size, hidden_size),
        "whr": lin_w(ks[2], hidden_size, hidden_size),
        "wxz": lin_w(ks[3], input_size, hidden_size),
        "bxz": lin_b(ks[4], input_size, hidden_size),
        "whz": lin_w(ks[5], hidden_size, hidden_size),
        # SAGEConv lin_l (neighbor aggregate, with bias) split over [x | r*h]
        "wl_x": lin_w(ks[6], cat_in, hidden_size)[:input_size],
        "wl_h": lin_w(ks[6], cat_in, hidden_size)[input_size:],
        "bl": lin_b(ks[7], cat_in, hidden_size),
        # SAGEConv lin_r (root, no bias) split over [x | r*h]
        "wr_x": lin_w(ks[8], cat_in, hidden_size)[:input_size],
        "wr_h": lin_w(ks[8], cat_in, hidden_size)[input_size:],
    }


if __name__ == "__main__":
    INPUT_SIZE, HIDDEN_SIZE = 8, 32
    key = jax.random.PRNGKey(0)
    k_x1, k_h1, k_p, k_x2, k_h2 = jax.random.split(key, 5)
    params = init_params(k_p, INPUT_SIZE, HIDDEN_SIZE)
    fused = fuse_params(params)

    def ring_edges(n):
        idx = jnp.arange(n, dtype=jnp.int32)
        src = jnp.concatenate([idx, (idx + 1) % n])
        dst = jnp.concatenate([(idx + 1) % n, idx])
        return jnp.stack([src, dst], axis=0)

    def run_and_check(n, kx, kh, impl):
        x = jax.random.normal(kx, (n, INPUT_SIZE), jnp.float32)
        h_prev = jax.random.normal(kh, (n, HIDDEN_SIZE), jnp.float32)
        edge_index = ring_edges(n)
        a_counts, inv_deg = edge_index_to_graph(edge_index, n)
        adj01_bf16 = a_counts.astype(jnp.bfloat16)   # exact 0/1 counts -> no bf16 error
        out = jax.block_until_ready(impl(x, adj01_bf16, inv_deg, h_prev, fused))
        ref = gcru_ref(x, edge_index, h_prev, params, n)
        assert out.shape == (n, HIDDEN_SIZE)
        max_diff = float(jnp.max(jnp.abs(out - ref)))
        # bf16 MXU operands (x/h/weights/proj); adjacency & 1/deg are now exact.
        assert jnp.allclose(out, ref, atol=4e-2, rtol=4e-2), (
            f"Pallas kernel mismatch vs reference at N={n} (max abs diff {max_diff})")

    # Small graph (module-consistent demo size) -> fused single-kernel path.
    run_and_check(16, k_x1, k_h1, gcru_cell)
    # Larger graph -> exercise the row-tiled two-kernel path explicitly.
    run_and_check(256, k_x2, k_h2, _gcru_cell_tiled)

    print("KERNEL_OK")
</pallas_src>

<mosaic_0001>
module attributes {stable_mosaic.version = 11 : i64} {
  func.func @gcru_fused_kernel(%arg0: i32, %arg1: memref<16x8xf32, #tpu.memory_space<vmem>>, %arg2: memref<16x32xf32, #tpu.memory_space<vmem>>, %arg3: memref<16x16xbf16, #tpu.memory_space<vmem>>, %arg4: memref<16x1xf32, #tpu.memory_space<vmem>>, %arg5: memref<8x128xbf16, #tpu.memory_space<vmem>>, %arg6: memref<32x128xbf16, #tpu.memory_space<vmem>>, %arg7: memref<32x64xbf16, #tpu.memory_space<vmem>>, %arg8: memref<1x128xf32, #tpu.memory_space<vmem>>, %arg9: memref<16x32xf32, #tpu.memory_space<vmem>>) attributes {dimension_semantics = [#tpu.dimension_semantics<arbitrary>], iteration_bounds = array<i64: 1>, scalar_prefetch = 0 : i64, scratch_operands = 0 : i64, tpu.core_type = #tpu.core_type<tc>, window_params = [{pipeline_mode = #tpu.pipeline_mode<synchronous>, transform_indices = @transform_0, window_bounds = array<i64: 16, 8>}, {pipeline_mode = #tpu.pipeline_mode<synchronous>, transform_indices = @transform_1, window_bounds = array<i64: 16, 32>}, {pipeline_mode = #tpu.pipeline_mode<synchronous>, transform_indices = @transform_2, window_bounds = array<i64: 16, 16>}, {pipeline_mode = #tpu.pipeline_mode<synchronous>, transform_indices = @transform_3, window_bounds = array<i64: 16, 1>}, {pipeline_mode = #tpu.pipeline_mode<synchronous>, transform_indices = @transform_4, window_bounds = array<i64: 8, 128>}, {pipeline_mode = #tpu.pipeline_mode<synchronous>, transform_indices = @transform_5, window_bounds = array<i64: 32, 128>}, {pipeline_mode = #tpu.pipeline_mode<synchronous>, transform_indices = @transform_6, window_bounds = array<i64: 32, 64>}, {pipeline_mode = #tpu.pipeline_mode<synchronous>, transform_indices = @transform_7, window_bounds = array<i64: 1, 128>}, {pipeline_mode = #tpu.pipeline_mode<synchronous>, transform_indices = @transform_8, window_bounds = array<i64: 16, 32>}]} {
    %c0 = arith.constant 0 : index
    %c0_0 = arith.constant 0 : index
    %0 = vector.load %arg1[%c0, %c0_0] : memref<16x8xf32, #tpu.memory_space<vmem>>, vector<16x8xf32>
    %c0_1 = arith.constant 0 : index
    %c0_2 = arith.constant 0 : index
    %1 = vector.load %arg2[%c0_1, %c0_2] : memref<16x32xf32, #tpu.memory_space<vmem>>, vector<16x32xf32>
    %c0_3 = arith.constant 0 : index
    %c0_4 = arith.constant 0 : index
    %2 = vector.load %arg4[%c0_3, %c0_4] : memref<16x1xf32, #tpu.memory_space<vmem>>, vector<16x1xf32>
    %c0_5 = arith.constant 0 : index
    %c0_6 = arith.constant 0 : index
    %3 = vector.load %arg5[%c0_5, %c0_6] : memref<8x128xbf16, #tpu.memory_space<vmem>>, vector<8x128xbf16>
    %c0_7 = arith.constant 0 : index
    %c0_8 = arith.constant 0 : index
    %4 = vector.load %arg6[%c0_7, %c0_8] : memref<32x128xbf16, #tpu.memory_space<vmem>>, vector<32x128xbf16>
    %c0_9 = arith.constant 0 : index
    %c0_10 = arith.constant 0 : index
    %5 = vector.load %arg7[%c0_9, %c0_10] : memref<32x64xbf16, #tpu.memory_space<vmem>>, vector<32x64xbf16>
    %c0_11 = arith.constant 0 : index
    %c0_12 = arith.constant 0 : index
    %6 = vector.load %arg8[%c0_11, %c0_12] : memref<1x128xf32, #tpu.memory_space<vmem>>, vector<1x128xf32>
    %7 = arith.truncf %0 : vector<16x8xf32> to vector<16x8xbf16>
    %cst = arith.constant dense<0.000000e+00> : vector<16x128xf32>
    %8 = tpu.matmul %7, %3, %cst {dimension_numbers = #tpu.dot_dimension_numbers<[1], [0], [0], [1], [0, 0, 1, 1], [], []>} : vector<16x8xbf16>, vector<8x128xbf16>, vector<16x128xf32> -> vector<16x128xf32>
    %9 = arith.truncf %1 : vector<16x32xf32> to vector<16x32xbf16>
    %cst_13 = arith.constant dense<0.000000e+00> : vector<16x128xf32>
    %10 = tpu.matmul %9, %4, %cst_13 {dimension_numbers = #tpu.dot_dimension_numbers<[1], [0], [0], [1], [0, 0, 1, 1], [], []>} : vector<16x32xbf16>, vector<32x128xbf16>, vector<16x128xf32> -> vector<16x128xf32>
    %11 = arith.addf %8, %10 : vector<16x128xf32>
    %12 = vector.broadcast %6 : vector<1x128xf32> to vector<16x128xf32>
    %13 = arith.addf %11, %12 : vector<16x128xf32>
    %14 = vector.extract_strided_slice %13 {offsets = [0, 0], sizes = [16, 32], strides = [1, 1]} : vector<16x128xf32> to vector<16x32xf32>
    %15 = arith.negf %14 : vector<16x32xf32>
    %16 = math.exp %15 : vector<16x32xf32>
    %cst_14 = arith.constant 1.000000e+00 : f32
    %17 = vector.broadcast %cst_14 : f32 to vector<16x32xf32>
    %18 = arith.addf %17, %16 : vector<16x32xf32>
    %19 = arith.divf %17, %18 : vector<16x32xf32>
    %20 = vector.extract_strided_slice %13 {offsets = [0, 32], sizes = [16, 32], strides = [1, 1]} : vector<16x128xf32> to vector<16x32xf32>
    %21 = arith.negf %20 : vector<16x32xf32>
    %22 = math.exp %21 : vector<16x32xf32>
    %cst_15 = arith.constant 1.000000e+00 : f32
    %23 = vector.broadcast %cst_15 : f32 to vector<16x32xf32>
    %24 = arith.addf %23, %22 : vector<16x32xf32>
    %25 = arith.divf %23, %24 : vector<16x32xf32>
    %26 = arith.mulf %19, %1 : vector<16x32xf32>
    %27 = arith.truncf %26 : vector<16x32xf32> to vector<16x32xbf16>
    %cst_16 = arith.constant dense<0.000000e+00> : vector<16x64xf32>
    %28 = tpu.matmul %27, %5, %cst_16 {dimension_numbers = #tpu.dot_dimension_numbers<[1], [0], [0], [1], [0, 0, 1, 1], [], []>} : vector<16x32xbf16>, vector<32x64xbf16>, vector<16x64xf32> -> vector<16x64xf32>
    %29 = vector.extract_strided_slice %13 {offsets = [0, 64], sizes = [16, 32], strides = [1, 1]} : vector<16x128xf32> to vector<16x32xf32>
    %30 = vector.extract_strided_slice %28 {offsets = [0, 0], sizes = [16, 32], strides = [1, 1]} : vector<16x64xf32> to vector<16x32xf32>
    %31 = arith.addf %29, %30 : vector<16x32xf32>
    %32 = vector.extract_strided_slice %13 {offsets = [0, 96], sizes = [16, 32], strides = [1, 1]} : vector<16x128xf32> to vector<16x32xf32>
    %33 = vector.extract_strided_slice %28 {offsets = [0, 32], sizes = [16, 32], strides = [1, 1]} : vector<16x64xf32> to vector<16x32xf32>
    %34 = arith.addf %32, %33 : vector<16x32xf32>
    %cst_17 = arith.constant 1.000000e+00 : f32
    %35 = vector.broadcast %cst_17 : f32 to vector<16x32xf32>
    %36 = arith.subf %35, %25 : vector<16x32xf32>
    %37 = vector.broadcast %2 : vector<16x1xf32> to vector<16x32xf32>
    %38 = arith.mulf %36, %37 : vector<16x32xf32>
    %39 = arith.mulf %36, %34 : vector<16x32xf32>
    %40 = arith.mulf %25, %1 : vector<16x32xf32>
    %41 = arith.addf %39, %40 : vector<16x32xf32>
    %c0_18 = arith.constant 0 : index
    %c0_19 = arith.constant 0 : index
    %42 = vector.load %arg3[%c0_18, %c0_19] : memref<16x16xbf16, #tpu.memory_space<vmem>>, vector<16x16xbf16>
    %43 = arith.truncf %31 : vector<16x32xf32> to vector<16x32xbf16>
    %cst_20 = arith.constant dense<0.000000e+00> : vector<16x32xf32>
    %44 = tpu.matmul %42, %43, %cst_20 {dimension_numbers = #tpu.dot_dimension_numbers<[1], [0], [0], [1], [0, 0, 1, 1], [], []>} : vector<16x16xbf16>, vector<16x32xbf16>, vector<16x32xf32> -> vector<16x32xf32>
    %45 = arith.mulf %38, %44 : vector<16x32xf32>
    %46 = arith.addf %45, %41 : vector<16x32xf32>
    %c0_21 = arith.constant 0 : index
    %c0_22 = arith.constant 0 : index
    %47 = vector.load %arg9[%c0_21, %c0_22] : memref<16x32xf32, #tpu.memory_space<vmem>>, vector<16x32xf32>
    tpu.vector_store %arg9[%c0_21, %c0_22], %46 {strides = array<i32>} : memref<16x32xf32, #tpu.memory_space<vmem>>, vector<16x32xf32>,
    return
  }
  func.func @transform_0(%arg0: i32) -> (i32, i32) {
    %c0_i32 = arith.constant 0 : i32
    %c0_i32_0 = arith.constant 0 : i32
    %c0_i32_1 = arith.constant 0 : i32
    return %c0_i32, %c0_i32_0 : i32, i32
  }
  func.func @transform_1(%arg0: i32) -> (i32, i32) {
    %c0_i32 = arith.constant 0 : i32
    %c0_i32_0 = arith.constant 0 : i32
    %c0_i32_1 = arith.constant 0 : i32
    return %c0_i32, %c0_i32_0 : i32, i32
  }
  func.func @transform_2(%arg0: i32) -> (i32, i32) {
    %c0_i32 = arith.constant 0 : i32
    %c0_i32_0 = arith.constant 0 : i32
    %c0_i32_1 = arith.constant 0 : i32
    return %c0_i32, %c0_i32_0 : i32, i32
  }
  func.func @transform_3(%arg0: i32) -> (i32, i32) {
    %c0_i32 = arith.constant 0 : i32
    %c0_i32_0 = arith.constant 0 : i32
    %c0_i32_1 = arith.constant 0 : i32
    return %c0_i32, %c0_i32_0 : i32, i32
  }
  func.func @transform_4(%arg0: i32) -> (i32, i32) {
    %c0_i32 = arith.constant 0 : i32
    %c0_i32_0 = arith.constant 0 : i32
    %c0_i32_1 = arith.constant 0 : i32
    return %c0_i32, %c0_i32_0 : i32, i32
  }
  func.func @transform_5(%arg0: i32) -> (i32, i32) {
    %c0_i32 = arith.constant 0 : i32
    %c0_i32_0 = arith.constant 0 : i32
    %c0_i32_1 = arith.constant 0 : i32
    return %c0_i32, %c0_i32_0 : i32, i32
  }
  func.func @transform_6(%arg0: i32) -> (i32, i32) {
    %c0_i32 = arith.constant 0 : i32
    %c0_i32_0 = arith.constant 0 : i32
    %c0_i32_1 = arith.constant 0 : i32
    return %c0_i32, %c0_i32_0 : i32, i32
  }
  func.func @transform_7(%arg0: i32) -> (i32, i32) {
    %c0_i32 = arith.constant 0 : i32
    %c0_i32_0 = arith.constant 0 : i32
    %c0_i32_1 = arith.constant 0 : i32
    return %c0_i32, %c0_i32_0 : i32, i32
  }
  func.func @transform_8(%arg0: i32) -> (i32, i32) {
    %c0_i32 = arith.constant 0 : i32
    %c0_i32_0 = arith.constant 0 : i32
    %c0_i32_1 = arith.constant 0 : i32
    return %c0_i32, %c0_i32_0 : i32, i32
  }
}

</mosaic_0001>

<llo_original>
// kernel: _gcru_cell_fused.1
$region0: #{_gcru_cell_fused.1}
  #allocation0 [shape = 'u32[]', space=smem, size = 0x4, offset = 0x4, fixed_abs, tag = 'smem constant byte address 0x4 - core index']
  #allocation1 [shape = 'u32[144,128]{1,0:T(1,128)}', space=vmem, size = 0x12000, scoped, tag = 'internal scratch']
  %s0 = inlined_call_operand.vmem [shape: f32[16,8], index: 0, kind: input, shape index: {}]
  %s1 = inlined_call_operand.vmem [shape: f32[16,32], index: 1, kind: input, shape index: {}]
  %s2 = inlined_call_operand.hbm [shape: bf16[16,16], index: 2, kind: input, shape index: {}]
  %s3 = inlined_call_operand.vmem [shape: f32[16,1], index: 3, kind: input, shape index: {}]
  %s4 = inlined_call_operand.vmem [shape: bf16[8,128], index: 4, kind: input, shape index: {}]
  %s5 = inlined_call_operand.vmem [shape: bf16[32,128], index: 5, kind: input, shape index: {}]
  %s6 = inlined_call_operand.vmem [shape: bf16[32,64], index: 6, kind: input, shape index: {}]
  %s7 = inlined_call_operand.hbm [shape: f32[1,128], index: 7, kind: input, shape index: {}]
  %s8 = inlined_call_operand.hbm [shape: f32[16,32], index: 8, kind: output, shape index: {}]
  %s9 = sld [smem:[#allocation0]]
  $region50: #{_gcru_cell_fused.1} parent=0
    _
  %s11 = ssub.s32 1, %s9
  %s12 = scalar_select 0, %s11, %s9
  $region1: #{_gcru_cell_fused.1} parent=0
    #allocation2 [shape = 'u8[4096]{0}', space=vmem, size = 0x1000, scoped, tag = 'input window, operand 2, single buffered']
    #allocation3 [shape = 's32[1]{0}', space=sflag, size = 0x4, scoped, tag = 'scoped memory for _gcru_cell_fused.1']
    #allocation4 [shape = 's32[1]{0}', space=sflag, size = 0x4, scoped, tag = 'scoped memory for _gcru_cell_fused.1']
    #allocation5 [shape = 'u8[512]{0}', space=vmem, size = 0x400, scoped, tag = 'input window, operand 7, single buffered']
    #allocation6 [shape = 's32[1]{0}', space=sflag, size = 0x4, scoped, tag = 'scoped memory for _gcru_cell_fused.1']
    #allocation7 [shape = 'u8[8192]{0}', space=vmem, size = 0x2000, scoped, tag = 'output window, operand 0, single buffered']
    %13 = vsyncpa [#allocation3], 0
    %14 = vsyncpa [#allocation6], 0
    %15 = vsyncpa [#allocation4], 0
    // Predicated region
    $region2: #{_gcru_cell_fused.1} parent=1 // pred_check
      _
    $region3: #{_gcru_cell_fused.1} parent=1 // pred_check_branch
      %17 = sbr.rel (0) target = $region5
    $region4: #{_gcru_cell_fused.1} parent=1 // pred_region
      _
    $region5: #{_gcru_cell_fused.1} parent=1 // pred_fallthru
      _
    // Predicated region
    $region6: #{_gcru_cell_fused.1} parent=1 // pred_check
      _
    $region7: #{_gcru_cell_fused.1} parent=1 // pred_check_branch
      %19 = sbr.rel (0) target = $region9
    $region8: #{_gcru_cell_fused.1} parent=1 // pred_region
      _
    $region9: #{_gcru_cell_fused.1} parent=1 // pred_fallthru
      _
    // Predicated region
    $region10: #{_gcru_cell_fused.1} parent=1 // pred_check
      _
    $region11: #{_gcru_cell_fused.1} parent=1 // pred_check_branch
      %21 = sbr.rel (0) target = $region13
    $region12: #{_gcru_cell_fused.1} parent=1 // pred_region
      %s23 = ssub.s32 128, 128
      %24 = vsyncadd [#allocation3], %s23
      %s25 = sshll.u32 [#allocation2], 4
      %s26 = int_to_ptr.vmem [resolvable:$true] %s25
      %31 = dma.hbm_to_vmem [thread:$0]  %s2, 128, %s26, [#allocation3], 64, 64, 4
    $region13: #{_gcru_cell_fused.1} parent=1 // pred_fallthru
      _
    // Predicated region
    $region14: #{_gcru_cell_fused.1} parent=1 // pred_check
      _
    $region15: #{_gcru_cell_fused.1} parent=1 // pred_check_branch
      %33 = sbr.rel (0) target = $region17
    $region16: #{_gcru_cell_fused.1} parent=1 // pred_region
      _
    $region17: #{_gcru_cell_fused.1} parent=1 // pred_fallthru
      _
    // Predicated region
    $region18: #{_gcru_cell_fused.1} parent=1 // pred_check
      _
    $region19: #{_gcru_cell_fused.1} parent=1 // pred_check_branch
      %35 = sbr.rel (0) target = $region21
    $region20: #{_gcru_cell_fused.1} parent=1 // pred_region
      _
    $region21: #{_gcru_cell_fused.1} parent=1 // pred_fallthru
      _
    // Predicated region
    $region22: #{_gcru_cell_fused.1} parent=1 // pred_check
      _
    $region23: #{_gcru_cell_fused.1} parent=1 // pred_check_branch
      %37 = sbr.rel (0) target = $region25
    $region24: #{_gcru_cell_fused.1} parent=1 // pred_region
      _
    $region25: #{_gcru_cell_fused.1} parent=1 // pred_fallthru
      _
    // Predicated region
    $region26: #{_gcru_cell_fused.1} parent=1 // pred_check
      _
    $region27: #{_gcru_cell_fused.1} parent=1 // pred_check_branch
      %39 = sbr.rel (0) target = $region29
    $region28: #{_gcru_cell_fused.1} parent=1 // pred_region
      _
    $region29: #{_gcru_cell_fused.1} parent=1 // pred_fallthru
      _
    // Predicated region
    $region30: #{_gcru_cell_fused.1} parent=1 // pred_check
      _
    $region31: #{_gcru_cell_fused.1} parent=1 // pred_check_branch
      %41 = sbr.rel (0) target = $region33
    $region32: #{_gcru_cell_fused.1} parent=1 // pred_region
      %s43 = ssub.s32 16, 16
      %44 = vsyncadd [#allocation6], %s43
      %s46 = sshll.u32 [#allocation5], 4
      %s47 = int_to_ptr.vmem [resolvable:$true] %s46
      %49 = dma.hbm_to_vmem [thread:$0]  %s7, 16, %s47, [#allocation6]
    $region33: #{_gcru_cell_fused.1} parent=1 // pred_fallthru
      _
    // Predicated region
    $region34: #{_gcru_cell_fused.1} parent=1 // pred_check
      _
    $region35: #{_gcru_cell_fused.1} parent=1 // pred_check_branch
      %51 = sbr.rel (0) target = $region37
    $region36: #{_gcru_cell_fused.1} parent=1 // pred_region
      %52 = dma.done [#allocation3], 128
    $region37: #{_gcru_cell_fused.1} parent=1 // pred_fallthru
      _
    // Predicated region
    $region38: #{_gcru_cell_fused.1} parent=1 // pred_check
      _
    $region39: #{_gcru_cell_fused.1} parent=1 // pred_check_branch
      %54 = sbr.rel (0) target = $region41
    $region40: #{_gcru_cell_fused.1} parent=1 // pred_region
      %55 = dma.done [#allocation6], 16
    $region41: #{_gcru_cell_fused.1} parent=1 // pred_fallthru
      _
    %v57 = vld [vmem:[%s0] sm:$0xff]
    %v58 = vld [vmem:[%s0 + $0x8] sm:$0xff]
    %v59 = vld [vmem:[%s1] sm:$0xff]
    %v60 = vld [vmem:[%s1 + $0x8] sm:$0xff]
    %v61 = vld [vmem:[%s3] sm:$0xff]
    %v62 = vld [vmem:[%s3 + $0x8] sm:$0xff]
    %v63 = vld [vmem:[%s4] sm:$0xf]
    %v64 = vld [vmem:[%s5] sm:$0xf]
    %v65 = vld [vmem:[%s5 + $0x4] sm:$0xf]
    %v66 = vld [vmem:[%s5 + $0x8] sm:$0xf]
    %v67 = vld [vmem:[%s5 + $0xc] sm:$0xf]
    %v68 = vld [vmem:[%s6] sm:$0xf]
    %v69 = vld [vmem:[%s6 + $0x4] sm:$0xf]
    %v70 = vld [vmem:[%s6 + $0x8] sm:$0xf]
    %v71 = vld [vmem:[%s6 + $0xc] sm:$0xf]
    %v72 = vld [vmem:[#allocation5] sm:$0x1]
    %v73 = vpack.c.bf16 %v58, %v57
    %v74 = vpack.c.bf16 %v60, %v59
    %v79 = vunpack.c.l.b16 %v64
    %v80 = vunpack.c.l.b16 %v65
    %v81 = vunpack.c.l.b16 %v66
    %v82 = vunpack.c.l.b16 %v67
    %v83 = vpack.c.b16 %v80, %v79
    %v84 = vpack.c.b16 %v82, %v81
    %vm87 = vcmask 261120
    %v89 = vsel %vm87, %v74, 0
    %91 = vmatprep.subr.bf16.mxu0 0
    %92 = vmatpush1.bf16.msra.mxu0 0
    %93 = vmatprep.subr.bf16.mxu0 0
    %94 = vmatpush1.bf16.msra.mxu0 0
    %95 = vmatprep.subr.bf16.mxu0 0
    %96 = vmatpush1.bf16.msra.mxu0 0
    %97 = vmatprep.subr.bf16.mxu0 0
    %98 = vmatpush1.bf16.msra.mxu0 0
    %99 = vmatprep.subr.bf16.mxu0 0
    %100 = vmatpush1.bf16.msra.mxu0 0
    %101 = vmatprep.subr.bf16.mxu0 0
    %102 = vmatpush1.bf16.msra.mxu0 0
    %103 = vmatprep.subr.bf16.mxu0 0
    %104 = vmatpush1.bf16.msra.mxu0 %v84
    %105 = vmatprep.subr.bf16.mxu0 0
    %106 = vmatpush1.bf16.msra.mxu0 %v83
    %107 = vmatprep.subr.bf16.mxu0 0
    %108 = vmatpush2.bf16.msra.mxu0 0
    %109 = vmatprep.subr.bf16.mxu0 0
    %110 = vmatpush2.bf16.msra.mxu0 0
    %111 = vmatprep.subr.bf16.mxu0 0
    %112 = vmatpush2.bf16.msra.mxu0 0
    %113 = vmatprep.subr.bf16.mxu0 0
    %114 = vmatpush2.bf16.msra.mxu0 0
    %115 = vmatprep.subr.bf16.mxu0 0
    %116 = vmatpush2.bf16.msra.mxu0 0
    %117 = vmatprep.subr.bf16.mxu0 0
    %118 = vmatpush2.bf16.msra.mxu0 0
    %119 = vmatprep.subr.bf16.mxu0 0
    %120 = vmatpush2.bf16.msra.mxu0 0
    %121 = vmatprep.subr.bf16.mxu0 0
    %122 = vmatpush2.bf16.msra.mxu0 0
    %123 = vmatprep.mubr.bf16.mxu0 0
    %124 = vmatmul.mubr.bf16.gmra.mxu0 %v89
    %v125 = vpop.f32.mrf.mxu0
    %v126 = vadd.f32 0.0, %v125
    %v127 = vpop.f32.mrf.mxu0
    %v128 = vpop.f32.mrf.mxu0
    %v129 = vadd.f32 0.0, %v128
    %v130 = vpop.f32.mrf.mxu0
    %131 = vdwg.mxu0
    %vm132 = vcmask 64512
    %v134 = vsel %vm132, %v73, 0
    %vm136 = vcmask 1043456
    %v138 = vsel %vm136, %v63, 0
    %140 = vmatprep.subr.bf16.mxu0 0
    %141 = vmatpush1.bf16.msra.mxu0 0
    %142 = vmatprep.subr.bf16.mxu0 0
    %143 = vmatpush1.bf16.msra.mxu0 0
    %144 = vmatprep.subr.bf16.mxu0 0
    %145 = vmatpush1.bf16.msra.mxu0 0
    %146 = vmatprep.subr.bf16.mxu0 0
    %147 = vmatpush1.bf16.msra.mxu0 0
    %148 = vmatprep.subr.bf16.mxu0 0
    %149 = vmatpush1.bf16.msra.mxu0 0
    %150 = vmatprep.subr.bf16.mxu0 0
    %151 = vmatpush1.bf16.msra.mxu0 0
    %152 = vmatprep.subr.bf16.mxu0 0
    %153 = vmatpush1.bf16.msra.mxu0 0
    %154 = vmatprep.subr.bf16.mxu0 0
    %155 = vmatpush1.bf16.msra.mxu0 %v138
    %156 = vmatprep.subr.bf16.mxu0 0
    %157 = vmatpush2.bf16.msra.mxu0 0
    %158 = vmatprep.subr.bf16.mxu0 0
    %159 = vmatpush2.bf16.msra.mxu0 0
    %160 = vmatprep.subr.bf16.mxu0 0
    %161 = vmatpush2.bf16.msra.mxu0 0
    %162 = vmatprep.subr.bf16.mxu0 0
    %163 = vmatpush2.bf16.msra.mxu0 0
    %164 = vmatprep.subr.bf16.mxu0 0
    %165 = vmatpush2.bf16.msra.mxu0 0
    %166 = vmatprep.subr.bf16.mxu0 0
    %167 = vmatpush2.bf16.msra.mxu0 0
    %168 = vmatprep.subr.bf16.mxu0 0
    %169 = vmatpush2.bf16.msra.mxu0 0
    %170 = vmatprep.subr.bf16.mxu0 0
    %171 = vmatpush2.bf16.msra.mxu0 0
    %172 = vmatprep.mubr.bf16.mxu0 0
    %173 = vmatmul.mubr.bf16.gmra.mxu0 %v134
    %v174 = vpop.f32.mrf.mxu0
    %v175 = vadd.f32 %v126, %v174
    %v176 = vpop.f32.mrf.mxu0
    %v177 = vpop.f32.mrf.mxu0
    %v178 = vadd.f32 %v129, %v177
    %v179 = vpop.f32.mrf.mxu0
    %180 = vdwg.mxu0
    %v182 = vlaneseq
    %v183 = vshrl.u32 %v182, 7
    %v184 = vsub.s32 0, %v183
    %v185 = vrot.slane %v72, %v184
    %v187 = vadd.f32 %v175, %v185
    %v188 = vadd.f32 %v178, %v185
    %v189 = vxor.u32 %v187, 2147483648
    %v190 = vxor.u32 %v188, 2147483648
    %v191 = vmul.f32 %v189, 1.442695
    %v192 = vpow.pop %v191
    %v193 = vmul.f32 %v190, 1.442695
    %v194 = vpow.pop %v193
    %v195 = vadd.f32 %v192, 1.0
    %v196 = vadd.f32 %v194, 1.0
    %v197 = vrcp.pop %v195
    %v198 = vmul.f32 1.0, %v197
    %v199 = vrcp.pop %v196
    %v200 = vmul.f32 1.0, %v199
    %v201 = vmul.f32 %v198, %v59
    %v202 = vmul.f32 %v200, %v60
    %v203 = vpack.c.bf16 %v202, %v201
    %v208 = vunpack.c.l.b16 %v68
    %v209 = vunpack.c.l.b16 %v69
    %v210 = vunpack.c.l.b16 %v70
    %v211 = vunpack.c.l.b16 %v71
    %v212 = vpack.c.b16 %v209, %v208
    %v213 = vpack.c.b16 %v211, %v210
    %v217 = vsel %vm87, %v203, 0
    %219 = vmatprep.subr.bf16.mxu0 0
    %220 = vmatpush1.bf16.msra.mxu0 0
    %221 = vmatprep.subr.bf16.mxu0 0
    %222 = vmatpush1.bf16.msra.mxu0 0
    %223 = vmatprep.subr.bf16.mxu0 0
    %224 = vmatpush1.bf16.msra.mxu0 0
    %225 = vmatprep.subr.bf16.mxu0 0
    %226 = vmatpush1.bf16.msra.mxu0 0
    %227 = vmatprep.subr.bf16.mxu0 0
    %228 = vmatpush1.bf16.msra.mxu0 0
    %229 = vmatprep.subr.bf16.mxu0 0
    %230 = vmatpush1.bf16.msra.mxu0 0
    %231 = vmatprep.subr.bf16.mxu0 0
    %232 = vmatpush1.bf16.msra.mxu0 %v213
    %233 = vmatprep.subr.bf16.mxu0 0
    %234 = vmatpush1.bf16.msra.mxu0 %v212
    %235 = vmatprep.subr.bf16.mxu0 0
    %236 = vmatpush2.bf16.msra.mxu0 0
    %237 = vmatprep.subr.bf16.mxu0 0
    %238 = vmatpush2.bf16.msra.mxu0 0
    %239 = vmatprep.subr.bf16.mxu0 0
    %240 = vmatpush2.bf16.msra.mxu0 0
    %241 = vmatprep.subr.bf16.mxu0 0
    %242 = vmatpush2.bf16.msra.mxu0 0
    %243 = vmatprep.subr.bf16.mxu0 0
    %244 = vmatpush2.bf16.msra.mxu0 0
    %245 = vmatprep.subr.bf16.mxu0 0
    %246 = vmatpush2.bf16.msra.mxu0 0
    %247 = vmatprep.subr.bf16.mxu0 0
    %248 = vmatpush2.bf16.msra.mxu0 0
    %249 = vmatprep.subr.bf16.mxu0 0
    %250 = vmatpush2.bf16.msra.mxu0 0
    %251 = vmatprep.mubr.bf16.mxu0 0
    %252 = vmatmul.mubr.bf16.gmra.mxu0 %v217
    %v253 = vpop.f32.mrf.mxu0
    %v254 = vadd.f32 0.0, %v253
    %v255 = vpop.f32.mrf.mxu0
    %v256 = vpop.f32.mrf.mxu0
    %v257 = vadd.f32 0.0, %v256
    %v258 = vpop.f32.mrf.mxu0
    %259 = vdwg.mxu0
    %262 = vrot.lane.b32.xlu0 %v254, 64
    %v263 = vpop.permute.xlu0 %262
    %264 = vrot.lane.b32.xlu0 %v257, 64
    %v265 = vpop.permute.xlu0 %264
    %v268 = vadd.f32 %v187, %v263
    %v269 = vadd.f32 %v188, %v265
    %v270 = vsub.f32 1.0, %v198
    %v271 = vsub.f32 1.0, %v200
    %273 = vset.pattern.permute.xlu0 0
    %274 = vperm.xlu0 %273, %v61
    %v275 = vpop.permute.xlu0 %274
    %278 = vset.pattern.permute.xlu0 0
    %279 = vperm.xlu0 %278, %v62
    %v280 = vpop.permute.xlu0 %279
    %v282 = vmul.f32 %v270, %v275
    %v283 = vmul.f32 %v271, %v280
    %286 = vrot.lane.b32.xlu0 %v268, 64
    %v287 = vpop.permute.xlu0 %286
    %288 = vrot.lane.b32.xlu0 %v269, 64
    %v289 = vpop.permute.xlu0 %288
    %v292 = vmul.f32 %v270, %v287
    %v293 = vmul.f32 %v271, %v289
    %296 = vrot.lane.b32.xlu0 %v59, 32
    %v297 = vpop.permute.xlu0 %296
    %298 = vrot.lane.b32.xlu0 %v60, 32
    %v299 = vpop.permute.xlu0 %298
    %v302 = vmul.f32 %v198, %v297
    %v303 = vmul.f32 %v200, %v299
    %v304 = vadd.f32 %v292, %v302
    %v305 = vadd.f32 %v293, %v303
    %v306 = vld [vmem:[#allocation2] sm:$0xf]
    %v307 = vld [vmem:[#allocation2 + $0x4] sm:$0xf]
    %v308 = vpack.c.bf16 %v269, %v268
    %v311 = vunpack.c.l.b16 %v306
    %v312 = vunpack.c.l.b16 %v307
    %v313 = vpack.c.b16 %v312, %v311
    %315 = vrot.lane.b32.xlu0 %v308, 64
    %v316 = vpop.permute.xlu0 %315
    %vm318 = vcmask 130048
    %v320 = vsel %vm318, %v313, 0
    %322 = vmatprep.subr.bf16.mxu0 0
    %323 = vmatpush1.bf16.msra.mxu0 0
    %324 = vmatprep.subr.bf16.mxu0 0
    %325 = vmatpush1.bf16.msra.mxu0 0
    %326 = vmatprep.subr.bf16.mxu0 0
    %327 = vmatpush1.bf16.msra.mxu0 0
    %328 = vmatprep.subr.bf16.mxu0 0
    %329 = vmatpush1.bf16.msra.mxu0 0
    %330 = vmatprep.subr.bf16.mxu0 0
    %331 = vmatpush1.bf16.msra.mxu0 0
    %332 = vmatprep.subr.bf16.mxu0 0
    %333 = vmatpush1.bf16.msra.mxu0 0
    %334 = vmatprep.subr.bf16.mxu0 0
    %335 = vmatpush1.bf16.msra.mxu0 0
    %336 = vmatprep.subr.bf16.mxu0 0
    %337 = vmatpush1.bf16.msra.mxu0 %v316
    %338 = vmatprep.subr.bf16.mxu0 0
    %339 = vmatpush2.bf16.msra.mxu0 0
    %340 = vmatprep.subr.bf16.mxu0 0
    %341 = vmatpush2.bf16.msra.mxu0 0
    %342 = vmatprep.subr.bf16.mxu0 0
    %343 = vmatpush2.bf16.msra.mxu0 0
    %344 = vmatprep.subr.bf16.mxu0 0
    %345 = vmatpush2.bf16.msra.mxu0 0
    %346 = vmatprep.subr.bf16.mxu0 0
    %347 = vmatpush2.bf16.msra.mxu0 0
    %348 = vmatprep.subr.bf16.mxu0 0
    %349 = vmatpush2.bf16.msra.mxu0 0
    %350 = vmatprep.subr.bf16.mxu0 0
    %351 = vmatpush2.bf16.msra.mxu0 0
    %352 = vmatprep.subr.bf16.mxu0 0
    %353 = vmatpush2.bf16.msra.mxu0 0
    %354 = vmatprep.mubr.bf16.mxu0 0
    %355 = vmatmul.mubr.bf16.gmra.mxu0 %v320
    %v356 = vpop.f32.mrf.mxu0
    %v357 = vadd.f32 0.0, %v356
    %v358 = vpop.f32.mrf.mxu0
    %v359 = vpop.f32.mrf.mxu0
    %v360 = vadd.f32 0.0, %v359
    %v361 = vpop.f32.mrf.mxu0
    %362 = vdwg.mxu0
    %365 = vrot.lane.b32.xlu0 %v357, 32
    %v366 = vpop.permute.xlu0 %365
    %367 = vrot.lane.b32.xlu0 %v360, 32
    %v368 = vpop.permute.xlu0 %367
    %v371 = vmul.f32 %v282, %v366
    %v372 = vmul.f32 %v283, %v368
    %v373 = vadd.f32 %v371, %v304
    %v374 = vadd.f32 %v372, %v305
    %377 = vrot.lane.b32.xlu0 %v373, 96
    %v378 = vpop.permute.xlu0 %377
    %379 = vrot.lane.b32.xlu0 %v374, 96
    %v380 = vpop.permute.xlu0 %379
    %383 = vst.msk [vmem:[#allocation7] sm:$0xff] %vm87, %v378
    %384 = vst.msk [vmem:[#allocation7 + $0x8] sm:$0xff] %vm87, %v380
    // Predicated region
    $region42: #{_gcru_cell_fused.1} parent=1 // pred_check
      _
    $region43: #{_gcru_cell_fused.1} parent=1 // pred_check_branch
      %386 = sbr.rel (0) target = $region45
    $region44: #{_gcru_cell_fused.1} parent=1 // pred_region
      %s388 = ssub.s32 256, 256
      %389 = vsyncadd [#allocation4], %s388
      %s390 = sshll.u32 [#allocation7], 4
      %s391 = int_to_ptr.vmem [resolvable:$true] %s390
      %396 = dma.vmem_to_hbm [thread:$0]  %s391, 256, %s8, [#allocation4], 128, 128, 8
    $region45: #{_gcru_cell_fused.1} parent=1 // pred_fallthru
      _
    // Predicated region
    $region46: #{_gcru_cell_fused.1} parent=1 // pred_check
      _
    $region47: #{_gcru_cell_fused.1} parent=1 // pred_check_branch
      %398 = sbr.rel (0) target = $region49
    $region48: #{_gcru_cell_fused.1} parent=1 // pred_region
      %399 = dma.done [#allocation4], 256
    $region49: #{_gcru_cell_fused.1} parent=1 // pred_fallthru
      _
    %400 = vsyncpa [#allocation3], 1
    %401 = vsyncpa [#allocation6], 1
    %402 = vsyncpa [#allocation4], 1

</llo_original>
